<compile_context>
chip_gen: v6e
topology: v6e:2x2x1
jax: 0.10.0
libtpu: 0.0.40
codegen_flags: <defaults>
</compile_context>

<pallas_src>
import jax
import jax.numpy as jnp
from jax import lax
from jax.experimental import pallas as pl
from jax.experimental.pallas import tpu as pltpu

INPUT_SIZE = 28
NUM_CLASSES = 10
H1 = 150
H2 = 50
LEAKY_SLOPE = 0.01  # PyTorch F.leaky_relu default negative_slope
LANE = 128


def _leaky_relu(x):
    return jnp.where(x > 0, x, LEAKY_SLOPE * x)


def mlp_kernel(x_ref, w1_ref, b1_ref, w2_ref, b2_ref, w3_ref, b3_ref, o_ref):
    # x arrives in natural [TB, INPUT_SIZE] layout (batch on sublanes); the
    # cast + NT contraction relayout rides the otherwise-idle VPU/XLU slots.
    x = x_ref[...].astype(w1_ref.dtype)  # [TB, IN]

    # fc1: [H1, IN] x [TB, IN] contracted on IN -> [H1, TB] (batch on lanes)
    h = lax.dot_general(
        w1_ref[...], x,
        dimension_numbers=(((1,), (1,)), ((), ())),
        preferred_element_type=jnp.float32)
    h = _leaky_relu(h + b1_ref[...])

    # fc2: [H2, H1] @ [H1, TB] -> [H2, TB]
    h = jnp.dot(w2_ref[...], h.astype(w2_ref.dtype),
                preferred_element_type=jnp.float32)
    h = _leaky_relu(h + b2_ref[...])

    # fc3 (no activation): [C, H2] @ [H2, TB] -> [C, TB]
    out = jnp.dot(w3_ref[...], h.astype(w3_ref.dtype),
                  preferred_element_type=jnp.float32)
    o_ref[...] = (out + b3_ref[...]).astype(o_ref.dtype)
    # TODO(synk): fold biases into the matmuls (ones-row trick) only if a
    # bundle dump shows VPU/store slots binding after the HBM/MXU fixes.


def mlp_forward(x, params, *, tb=8192, compute_dtype=jnp.float32):
    """x: [B, INPUT_SIZE] -> [B, NUM_CLASSES] float32.

    compute_dtype=jnp.bfloat16 stores the resident weights in bf16 and runs
    the MXU in bf16 with f32 accumulation (recommended on v6e/v7x); biases,
    accumulators and the output stay f32.  Passing x already in bf16 also
    halves the dominant input-side HBM traffic.
    """
    w1, b1, w2, b2, w3, b3 = params
    B = x.shape[0]

    # Batch tile: multiple of 128 lanes (lane-dense output stores), capped at
    # `tb`, and split so the grid has >= 2 "parallel" steps when possible so
    # v7x can shard batch tiles across its two TensorCores.
    tb = max(LANE, (tb // LANE) * LANE)
    b_lane = pl.cdiv(B, LANE) * LANE
    tb_eff = min(tb, b_lane)
    if b_lane >= 2 * LANE:
        half = pl.cdiv(b_lane // 2, LANE) * LANE
        tb_eff = min(tb_eff, half)
    assert tb_eff % LANE == 0

    num_tiles = pl.cdiv(B, tb_eff)
    b_pad = num_tiles * tb_eff

    # No wrapper transpose; pad the batch only when ragged w.r.t. the tile
    # (a no-op for large batches that are already tile multiples).
    x_in = x if b_pad == B else jnp.pad(x, ((0, b_pad - B), (0, 0)))

    if compute_dtype != jnp.float32:
        w1 = w1.astype(compute_dtype)
        w2 = w2.astype(compute_dtype)
        w3 = w3.astype(compute_dtype)

    out_t = pl.pallas_call(
        mlp_kernel,
        out_shape=jax.ShapeDtypeStruct((NUM_CLASSES, b_pad), jnp.float32),
        grid=(num_tiles,),
        in_specs=[
            # activations: natural layout, tiled over batch, pipelined
            pl.BlockSpec((tb_eff, INPUT_SIZE), lambda i: (i, 0)),
            # weights / biases: full blocks, constant index_map -> VMEM-resident
            pl.BlockSpec((H1, INPUT_SIZE), lambda i: (0, 0)),
            pl.BlockSpec((H1, 1), lambda i: (0, 0)),
            pl.BlockSpec((H2, H1), lambda i: (0, 0)),
            pl.BlockSpec((H2, 1), lambda i: (0, 0)),
            pl.BlockSpec((NUM_CLASSES, H2), lambda i: (0, 0)),
            pl.BlockSpec((NUM_CLASSES, 1), lambda i: (0, 0)),
        ],
        out_specs=pl.BlockSpec((NUM_CLASSES, tb_eff), lambda i: (0, i)),
        compiler_params=pltpu.CompilerParams(
            dimension_semantics=("parallel",),
            vmem_limit_bytes=32 * 1024 * 1024,
        ),
    )(x_in, w1, b1, w2, b2, w3, b3)

    # Slice padded columns BEFORE the (small) transpose back to batch-major.
    return out_t[:, :B].T


def init_params(key):
    """Deterministic init matching the nn.Linear shapes of the module.

    Weights are kept in PyTorch [out_features, in_features] orientation (the
    kernel computes W @ X with batch on the lane axis); biases are
    [out_features, 1] so they broadcast along the batch/lane axis.
    """
    k1, k2, k3, k4, k5, k6 = jax.random.split(key, 6)

    def uniform(k, shape, fan_in):
        bound = 1.0 / jnp.sqrt(fan_in)
        return jax.random.uniform(k, shape, jnp.float32, -bound, bound)

    w1 = uniform(k1, (H1, INPUT_SIZE), INPUT_SIZE)
    b1 = uniform(k2, (H1, 1), INPUT_SIZE)
    w2 = uniform(k3, (H2, H1), H1)
    b2 = uniform(k4, (H2, 1), H1)
    w3 = uniform(k5, (NUM_CLASSES, H2), H2)
    b3 = uniform(k6, (NUM_CLASSES, 1), H2)
    return (w1, b1, w2, b2, w3, b3)


def reference_forward(x, params):
    """Pure-JAX reference of the PyTorch forward pass."""
    w1, b1, w2, b2, w3, b3 = params
    h = jax.nn.leaky_relu(x @ w1.T + b1[:, 0], LEAKY_SLOPE)
    h = jax.nn.leaky_relu(h @ w2.T + b2[:, 0], LEAKY_SLOPE)
    return h @ w3.T + b3[:, 0]


if __name__ == "__main__":
    key = jax.random.PRNGKey(0)
    pkey, xkey = jax.random.split(key)

    params = init_params(pkey)
    batch = 8
    x = jax.random.normal(xkey, (batch, INPUT_SIZE), jnp.float32)

    ref = reference_forward(x, params)

    # f32 path: exact semantics of the PyTorch module.
    out = jax.block_until_ready(mlp_forward(x, params))
    assert out.shape == (batch, NUM_CLASSES)
    assert jnp.allclose(out, ref, atol=1e-5, rtol=1e-5)

    # bf16-weight path (v6e/v7x recommendation): f32 accumulation, looser tol.
    out_bf16 = jax.block_until_ready(
        mlp_forward(x, params, compute_dtype=jnp.bfloat16))
    assert out_bf16.shape == (batch, NUM_CLASSES)
    assert jnp.allclose(out_bf16, ref, atol=5e-2, rtol=5e-2)

    print("KERNEL_OK")
</pallas_src>

<mosaic_0001>
module attributes {stable_mosaic.version = 11 : i64} {
  func.func @mlp_kernel(%arg0: i32, %arg1: memref<128x28xf32, #tpu.memory_space<vmem>>, %arg2: memref<150x28xf32, #tpu.memory_space<vmem>>, %arg3: memref<150x1xf32, #tpu.memory_space<vmem>>, %arg4: memref<50x150xf32, #tpu.memory_space<vmem>>, %arg5: memref<50x1xf32, #tpu.memory_space<vmem>>, %arg6: memref<10x50xf32, #tpu.memory_space<vmem>>, %arg7: memref<10x1xf32, #tpu.memory_space<vmem>>, %arg8: memref<10x128xf32, #tpu.memory_space<vmem>>) attributes {dimension_semantics = [#tpu.dimension_semantics<parallel>], iteration_bounds = array<i64: 1>, scalar_prefetch = 0 : i64, scratch_operands = 0 : i64, tpu.core_type = #tpu.core_type<tc>, window_params = [{transform_indices = @transform_0, window_bounds = array<i64: 128, 28>}, {pipeline_mode = #tpu.pipeline_mode<synchronous>, transform_indices = @transform_1, window_bounds = array<i64: 150, 28>}, {pipeline_mode = #tpu.pipeline_mode<synchronous>, transform_indices = @transform_2, window_bounds = array<i64: 150, 1>}, {pipeline_mode = #tpu.pipeline_mode<synchronous>, transform_indices = @transform_3, window_bounds = array<i64: 50, 150>}, {pipeline_mode = #tpu.pipeline_mode<synchronous>, transform_indices = @transform_4, window_bounds = array<i64: 50, 1>}, {pipeline_mode = #tpu.pipeline_mode<synchronous>, transform_indices = @transform_5, window_bounds = array<i64: 10, 50>}, {pipeline_mode = #tpu.pipeline_mode<synchronous>, transform_indices = @transform_6, window_bounds = array<i64: 10, 1>}, {transform_indices = @transform_7, window_bounds = array<i64: 10, 128>}]} {
    %c0 = arith.constant 0 : index
    %c0_0 = arith.constant 0 : index
    %0 = vector.load %arg1[%c0, %c0_0] : memref<128x28xf32, #tpu.memory_space<vmem>>, vector<128x28xf32>
    %c0_1 = arith.constant 0 : index
    %c0_2 = arith.constant 0 : index
    %1 = vector.load %arg2[%c0_1, %c0_2] : memref<150x28xf32, #tpu.memory_space<vmem>>, vector<150x28xf32>
    %cst = arith.constant dense<0.000000e+00> : vector<150x128xf32>
    %2 = tpu.matmul %1, %0, %cst {dimension_numbers = #tpu.dot_dimension_numbers<[1], [1], [0], [0], [0, 0, 1, 0], [], []>} : vector<150x28xf32>, vector<128x28xf32>, vector<150x128xf32> -> vector<150x128xf32>
    %c0_3 = arith.constant 0 : index
    %c0_4 = arith.constant 0 : index
    %3 = vector.load %arg3[%c0_3, %c0_4] : memref<150x1xf32, #tpu.memory_space<vmem>>, vector<150x1xf32>
    %4 = vector.broadcast %3 : vector<150x1xf32> to vector<150x128xf32>
    %5 = arith.addf %2, %4 : vector<150x128xf32>
    %cst_5 = arith.constant 0.000000e+00 : f32
    %6 = vector.broadcast %cst_5 : f32 to vector<150x128xf32>
    %7 = arith.cmpf ogt, %5, %6 : vector<150x128xf32>
    %cst_6 = arith.constant 0.00999999977 : f32
    %8 = vector.broadcast %cst_6 : f32 to vector<150x128xf32>
    %9 = arith.mulf %8, %5 : vector<150x128xf32>
    %10 = arith.select %7, %5, %9 : vector<150x128xi1>, vector<150x128xf32>
    %c0_7 = arith.constant 0 : index
    %c0_8 = arith.constant 0 : index
    %11 = vector.load %arg4[%c0_7, %c0_8] : memref<50x150xf32, #tpu.memory_space<vmem>>, vector<50x150xf32>
    %cst_9 = arith.constant dense<0.000000e+00> : vector<50x128xf32>
    %12 = tpu.matmul %11, %10, %cst_9 {dimension_numbers = #tpu.dot_dimension_numbers<[1], [0], [0], [1], [0, 0, 1, 1], [], []>} : vector<50x150xf32>, vector<150x128xf32>, vector<50x128xf32> -> vector<50x128xf32>
    %c0_10 = arith.constant 0 : index
    %c0_11 = arith.constant 0 : index
    %13 = vector.load %arg5[%c0_10, %c0_11] : memref<50x1xf32, #tpu.memory_space<vmem>>, vector<50x1xf32>
    %14 = vector.broadcast %13 : vector<50x1xf32> to vector<50x128xf32>
    %15 = arith.addf %12, %14 : vector<50x128xf32>
    %cst_12 = arith.constant 0.000000e+00 : f32
    %16 = vector.broadcast %cst_12 : f32 to vector<50x128xf32>
    %17 = arith.cmpf ogt, %15, %16 : vector<50x128xf32>
    %cst_13 = arith.constant 0.00999999977 : f32
    %18 = vector.broadcast %cst_13 : f32 to vector<50x128xf32>
    %19 = arith.mulf %18, %15 : vector<50x128xf32>
    %20 = arith.select %17, %15, %19 : vector<50x128xi1>, vector<50x128xf32>
    %c0_14 = arith.constant 0 : index
    %c0_15 = arith.constant 0 : index
    %21 = vector.load %arg6[%c0_14, %c0_15] : memref<10x50xf32, #tpu.memory_space<vmem>>, vector<10x50xf32>
    %cst_16 = arith.constant dense<0.000000e+00> : vector<10x128xf32>
    %22 = tpu.matmul %21, %20, %cst_16 {dimension_numbers = #tpu.dot_dimension_numbers<[1], [0], [0], [1], [0, 0, 1, 1], [], []>} : vector<10x50xf32>, vector<50x128xf32>, vector<10x128xf32> -> vector<10x128xf32>
    %c0_17 = arith.constant 0 : index
    %c0_18 = arith.constant 0 : index
    %23 = vector.load %arg7[%c0_17, %c0_18] : memref<10x1xf32, #tpu.memory_space<vmem>>, vector<10x1xf32>
    %24 = vector.broadcast %23 : vector<10x1xf32> to vector<10x128xf32>
    %25 = arith.addf %22, %24 : vector<10x128xf32>
    %c0_19 = arith.constant 0 : index
    %c0_20 = arith.constant 0 : index
    %26 = vector.load %arg8[%c0_19, %c0_20] : memref<10x128xf32, #tpu.memory_space<vmem>>, vector<10x128xf32>
    tpu.vector_store %arg8[%c0_19, %c0_20], %25 {strides = array<i32>} : memref<10x128xf32, #tpu.memory_space<vmem>>, vector<10x128xf32>,
    return
  }
  func.func @transform_0(%arg0: i32) -> (i32, i32) {
    %c0_i32 = arith.constant 0 : i32
    %c0_i32_0 = arith.constant 0 : i32
    return %arg0, %c0_i32 : i32, i32
  }
  func.func @transform_1(%arg0: i32) -> (i32, i32) {
    %c0_i32 = arith.constant 0 : i32
    %c0_i32_0 = arith.constant 0 : i32
    %c0_i32_1 = arith.constant 0 : i32
    return %c0_i32, %c0_i32_0 : i32, i32
  }
  func.func @transform_2(%arg0: i32) -> (i32, i32) {
    %c0_i32 = arith.constant 0 : i32
    %c0_i32_0 = arith.constant 0 : i32
    %c0_i32_1 = arith.constant 0 : i32
    return %c0_i32, %c0_i32_0 : i32, i32
  }
  func.func @transform_3(%arg0: i32) -> (i32, i32) {
    %c0_i32 = arith.constant 0 : i32
    %c0_i32_0 = arith.constant 0 : i32
    %c0_i32_1 = arith.constant 0 : i32
    return %c0_i32, %c0_i32_0 : i32, i32
  }
  func.func @transform_4(%arg0: i32) -> (i32, i32) {
    %c0_i32 = arith.constant 0 : i32
    %c0_i32_0 = arith.constant 0 : i32
    %c0_i32_1 = arith.constant 0 : i32
    return %c0_i32, %c0_i32_0 : i32, i32
  }
  func.func @transform_5(%arg0: i32) -> (i32, i32) {
    %c0_i32 = arith.constant 0 : i32
    %c0_i32_0 = arith.constant 0 : i32
    %c0_i32_1 = arith.constant 0 : i32
    return %c0_i32, %c0_i32_0 : i32, i32
  }
  func.func @transform_6(%arg0: i32) -> (i32, i32) {
    %c0_i32 = arith.constant 0 : i32
    %c0_i32_0 = arith.constant 0 : i32
    %c0_i32_1 = arith.constant 0 : i32
    return %c0_i32, %c0_i32_0 : i32, i32
  }
  func.func @transform_7(%arg0: i32) -> (i32, i32) {
    %c0_i32 = arith.constant 0 : i32
    %c0_i32_0 = arith.constant 0 : i32
    return %c0_i32, %arg0 : i32, i32
  }
}

</mosaic_0001>

<llo_original>
// kernel: tpu_custom_call.1
$region0: #{tpu_custom_call.1}
  #allocation0 [shape = 'u32[]', space=smem, size = 0x4, offset = 0x4, fixed_abs, tag = 'smem constant byte address 0x4 - core index']
  #allocation1 [shape = 'u32[144,128]{1,0:T(1,128)}', space=vmem, size = 0x12000, scoped, tag = 'internal scratch']
  %s0 = inlined_call_operand.vmem [shape: f32[128,28], index: 0, kind: input, shape index: {}]
  %s1 = inlined_call_operand.vmem [shape: f32[150,28], index: 1, kind: input, shape index: {}]
  %s2 = inlined_call_operand.vmem [shape: f32[150,1], index: 2, kind: input, shape index: {}]
  %s3 = inlined_call_operand.vmem [shape: f32[50,150], index: 3, kind: input, shape index: {}]
  %s4 = inlined_call_operand.vmem [shape: f32[50,1], index: 4, kind: input, shape index: {}]
  %s5 = inlined_call_operand.vmem [shape: f32[10,50], index: 5, kind: input, shape index: {}]
  %s6 = inlined_call_operand.vmem [shape: f32[10,1], index: 6, kind: input, shape index: {}]
  %s7 = inlined_call_operand.hbm [shape: f32[10,128], index: 7, kind: output, shape index: {}]
  %s8 = sld [smem:[#allocation0]]
  $region38: #{tpu_custom_call.1} parent=0
    _
  %s10 = ssub.s32 1, %s8
  %s11 = scalar_select 0, %s10, %s8
  $region1: #{tpu_custom_call.1} parent=0
    #allocation2 [shape = 'u8[8192]{0}', space=vmem, size = 0x2000, scoped, tag = 'output window, operand 0, single buffered']
    #allocation3 [shape = 's32[1]{0}', space=sflag, size = 0x4, scoped, tag = 'scoped memory for tpu_custom_call.1']
    %12 = vsyncpa [#allocation3], 0
    // Predicated region
    $region2: #{tpu_custom_call.1} parent=1 // pred_check
      _
    $region3: #{tpu_custom_call.1} parent=1 // pred_check_branch
      %14 = sbr.rel (0) target = $region5
    $region4: #{tpu_custom_call.1} parent=1 // pred_region
      _
    $region5: #{tpu_custom_call.1} parent=1 // pred_fallthru
      _
    // Predicated region
    $region6: #{tpu_custom_call.1} parent=1 // pred_check
      _
    $region7: #{tpu_custom_call.1} parent=1 // pred_check_branch
      %16 = sbr.rel (0) target = $region9
    $region8: #{tpu_custom_call.1} parent=1 // pred_region
      _
    $region9: #{tpu_custom_call.1} parent=1 // pred_fallthru
      _
    // Predicated region
    $region10: #{tpu_custom_call.1} parent=1 // pred_check
      _
    $region11: #{tpu_custom_call.1} parent=1 // pred_check_branch
      %18 = sbr.rel (0) target = $region13
    $region12: #{tpu_custom_call.1} parent=1 // pred_region
      _
    $region13: #{tpu_custom_call.1} parent=1 // pred_fallthru
      _
    // Predicated region
    $region14: #{tpu_custom_call.1} parent=1 // pred_check
      _
    $region15: #{tpu_custom_call.1} parent=1 // pred_check_branch
      %20 = sbr.rel (0) target = $region17
    $region16: #{tpu_custom_call.1} parent=1 // pred_region
      _
    $region17: #{tpu_custom_call.1} parent=1 // pred_fallthru
      _
    // Predicated region
    $region18: #{tpu_custom_call.1} parent=1 // pred_check
      _
    $region19: #{tpu_custom_call.1} parent=1 // pred_check_branch
      %22 = sbr.rel (0) target = $region21
    $region20: #{tpu_custom_call.1} parent=1 // pred_region
      _
    $region21: #{tpu_custom_call.1} parent=1 // pred_fallthru
      _
    // Predicated region
    $region22: #{tpu_custom_call.1} parent=1 // pred_check
      _
    $region23: #{tpu_custom_call.1} parent=1 // pred_check_branch
      %24 = sbr.rel (0) target = $region25
    $region24: #{tpu_custom_call.1} parent=1 // pred_region
      _
    $region25: #{tpu_custom_call.1} parent=1 // pred_fallthru
      _
    // Predicated region
    $region26: #{tpu_custom_call.1} parent=1 // pred_check
      _
    $region27: #{tpu_custom_call.1} parent=1 // pred_check_branch
      %26 = sbr.rel (0) target = $region29
    $region28: #{tpu_custom_call.1} parent=1 // pred_region
      _
    $region29: #{tpu_custom_call.1} parent=1 // pred_fallthru
      _
    %v27 = vld [vmem:[%s0] sm:$0xff]
    %v28 = vld [vmem:[%s0 + $0x8] sm:$0xff]
    %v29 = vld [vmem:[%s0 + $0x10] sm:$0xff]
    %v30 = vld [vmem:[%s0 + $0x18] sm:$0xff]
    %v31 = vld [vmem:[%s0 + $0x20] sm:$0xff]
    %v32 = vld [vmem:[%s0 + $0x28] sm:$0xff]
    %v33 = vld [vmem:[%s0 + $0x30] sm:$0xff]
    %v34 = vld [vmem:[%s0 + $0x38] sm:$0xff]
    %v35 = vld [vmem:[%s0 + $0x40] sm:$0xff]
    %v36 = vld [vmem:[%s0 + $0x48] sm:$0xff]
    %v37 = vld [vmem:[%s0 + $0x50] sm:$0xff]
    %v38 = vld [vmem:[%s0 + $0x58] sm:$0xff]
    %v39 = vld [vmem:[%s0 + $0x60] sm:$0xff]
    %v40 = vld [vmem:[%s0 + $0x68] sm:$0xff]
    %v41 = vld [vmem:[%s0 + $0x70] sm:$0xff]
    %v42 = vld [vmem:[%s0 + $0x78] sm:$0xff]
    %v43 = vld [vmem:[%s1] sm:$0xff]
    %v44 = vld [vmem:[%s1 + $0x8] sm:$0xff]
    %v45 = vld [vmem:[%s1 + $0x10] sm:$0xff]
    %v46 = vld [vmem:[%s1 + $0x18] sm:$0xff]
    %v47 = vld [vmem:[%s1 + $0x20] sm:$0xff]
    %v48 = vld [vmem:[%s1 + $0x28] sm:$0xff]
    %v49 = vld [vmem:[%s1 + $0x30] sm:$0xff]
    %v50 = vld [vmem:[%s1 + $0x38] sm:$0xff]
    %v51 = vld [vmem:[%s1 + $0x40] sm:$0xff]
    %v52 = vld [vmem:[%s1 + $0x48] sm:$0xff]
    %v53 = vld [vmem:[%s1 + $0x50] sm:$0xff]
    %v54 = vld [vmem:[%s1 + $0x58] sm:$0xff]
    %v55 = vld [vmem:[%s1 + $0x60] sm:$0xff]
    %v56 = vld [vmem:[%s1 + $0x68] sm:$0xff]
    %v57 = vld [vmem:[%s1 + $0x70] sm:$0xff]
    %v58 = vld [vmem:[%s1 + $0x78] sm:$0xff]
    %v59 = vld [vmem:[%s1 + $0x80] sm:$0xff]
    %v60 = vld [vmem:[%s1 + $0x88] sm:$0xff]
    %v61 = vld [vmem:[%s1 + $0x90] sm:$0x3f]
    %v62 = vld [vmem:[%s2] sm:$0xff]
    %v63 = vld [vmem:[%s2 + $0x8] sm:$0xff]
    %v64 = vld [vmem:[%s2 + $0x10] sm:$0xff]
    %v65 = vld [vmem:[%s2 + $0x18] sm:$0xff]
    %v66 = vld [vmem:[%s2 + $0x20] sm:$0xff]
    %v67 = vld [vmem:[%s2 + $0x28] sm:$0xff]
    %v68 = vld [vmem:[%s2 + $0x30] sm:$0xff]
    %v69 = vld [vmem:[%s2 + $0x38] sm:$0xff]
    %v70 = vld [vmem:[%s2 + $0x40] sm:$0xff]
    %v71 = vld [vmem:[%s2 + $0x48] sm:$0xff]
    %v72 = vld [vmem:[%s2 + $0x50] sm:$0xff]
    %v73 = vld [vmem:[%s2 + $0x58] sm:$0xff]
    %v74 = vld [vmem:[%s2 + $0x60] sm:$0xff]
    %v75 = vld [vmem:[%s2 + $0x68] sm:$0xff]
    %v76 = vld [vmem:[%s2 + $0x70] sm:$0xff]
    %v77 = vld [vmem:[%s2 + $0x78] sm:$0xff]
    %v78 = vld [vmem:[%s2 + $0x80] sm:$0xff]
    %v79 = vld [vmem:[%s2 + $0x88] sm:$0xff]
    %v80 = vld [vmem:[%s2 + $0x90] sm:$0x3f]
    %82 = vset.pattern.permute.xlu0 0
    %83 = vperm.xlu0 %82, %v62
    %v84 = vpop.permute.xlu0 %83
    %87 = vset.pattern.permute.xlu0 0
    %88 = vperm.xlu0 %87, %v63
    %v89 = vpop.permute.xlu0 %88
    %92 = vset.pattern.permute.xlu0 0
    %93 = vperm.xlu0 %92, %v64
    %v94 = vpop.permute.xlu0 %93
    %97 = vset.pattern.permute.xlu0 0
    %98 = vperm.xlu0 %97, %v65
    %v99 = vpop.permute.xlu0 %98
    %102 = vset.pattern.permute.xlu0 0
    %103 = vperm.xlu0 %102, %v66
    %v104 = vpop.permute.xlu0 %103
    %107 = vset.pattern.permute.xlu0 0
    %108 = vperm.xlu0 %107, %v67
    %v109 = vpop.permute.xlu0 %108
    %112 = vset.pattern.permute.xlu0 0
    %113 = vperm.xlu0 %112, %v68
    %v114 = vpop.permute.xlu0 %113
    %117 = vset.pattern.permute.xlu0 0
    %118 = vperm.xlu0 %117, %v69
    %v119 = vpop.permute.xlu0 %118
    %122 = vset.pattern.permute.xlu0 0
    %123 = vperm.xlu0 %122, %v70
    %v124 = vpop.permute.xlu0 %123
    %127 = vset.pattern.permute.xlu0 0
    %128 = vperm.xlu0 %127, %v71
    %v129 = vpop.permute.xlu0 %128
    %132 = vset.pattern.permute.xlu0 0
    %133 = vperm.xlu0 %132, %v72
    %v134 = vpop.permute.xlu0 %133
    %137 = vset.pattern.permute.xlu0 0
    %138 = vperm.xlu0 %137, %v73
    %v139 = vpop.permute.xlu0 %138
    %142 = vset.pattern.permute.xlu0 0
    %143 = vperm.xlu0 %142, %v74
    %v144 = vpop.permute.xlu0 %143
    %147 = vset.pattern.permute.xlu0 0
    %148 = vperm.xlu0 %147, %v75
    %v149 = vpop.permute.xlu0 %148
    %152 = vset.pattern.permute.xlu0 0
    %153 = vperm.xlu0 %152, %v76
    %v154 = vpop.permute.xlu0 %153
    %157 = vset.pattern.permute.xlu0 0
    %158 = vperm.xlu0 %157, %v77
    %v159 = vpop.permute.xlu0 %158
    %162 = vset.pattern.permute.xlu0 0
    %163 = vperm.xlu0 %162, %v78
    %v164 = vpop.permute.xlu0 %163
    %167 = vset.pattern.permute.xlu0 0
    %168 = vperm.xlu0 %167, %v79
    %v169 = vpop.permute.xlu0 %168
    %172 = vset.pattern.permute.xlu0 0
    %173 = vperm.xlu0 %172, %v80
    %v174 = vpop.permute.xlu0 %173
    %vm176 = vcmask 228352
    %v178 = vsel %vm176, %v43, 0
    %v181 = vsel %vm176, %v44, 0
    %v184 = vsel %vm176, %v45, 0
    %v187 = vsel %vm176, %v46, 0
    %v190 = vsel %vm176, %v47, 0
    %v193 = vsel %vm176, %v48, 0
    %v196 = vsel %vm176, %v49, 0
    %v199 = vsel %vm176, %v50, 0
    %v202 = vsel %vm176, %v51, 0
    %v205 = vsel %vm176, %v52, 0
    %v208 = vsel %vm176, %v53, 0
    %v211 = vsel %vm176, %v54, 0
    %v214 = vsel %vm176, %v55, 0
    %v217 = vsel %vm176, %v56, 0
    %v220 = vsel %vm176, %v57, 0
    %v223 = vsel %vm176, %v58, 0
    %v226 = vsel %vm176, %v59, 0
    %v229 = vsel %vm176, %v60, 0
    %v232 = vsel %vm176, %v61, 0
    %v235 = vsel %vm176, %v27, 0
    %v238 = vsel %vm176, %v28, 0
    %v241 = vsel %vm176, %v29, 0
    %v244 = vsel %vm176, %v30, 0
    %v247 = vsel %vm176, %v31, 0
    %v250 = vsel %vm176, %v32, 0
    %v253 = vsel %vm176, %v33, 0
    %v256 = vsel %vm176, %v34, 0
    %v259 = vsel %vm176, %v35, 0
    %v262 = vsel %vm176, %v36, 0
    %v265 = vsel %vm176, %v37, 0
    %v268 = vsel %vm176, %v38, 0
    %v271 = vsel %vm176, %v39, 0
    %v274 = vsel %vm176, %v40, 0
    %v277 = vsel %vm176, %v41, 0
    %v280 = vsel %vm176, %v42, 0
    %282 = vmatprep.subr.mxu0 0.0
    %283 = vmatpush1.xpose.msra.mxu0 %v280
    %284 = vmatprep.subr.mxu0 0.0
    %285 = vmatpush1.xpose.msra.mxu0 %v277
    %286 = vmatprep.subr.mxu0 0.0
    %287 = vmatpush1.xpose.msra.mxu0 %v274
    %288 = vmatprep.subr.mxu0 0.0
    %289 = vmatpush1.xpose.msra.mxu0 %v271
    %290 = vmatprep.subr.mxu0 0.0
    %291 = vmatpush1.xpose.msra.mxu0 %v268
    %292 = vmatprep.subr.mxu0 0.0
    %293 = vmatpush1.xpose.msra.mxu0 %v265
    %294 = vmatprep.subr.mxu0 0.0
    %295 = vmatpush1.xpose.msra.mxu0 %v262
    %296 = vmatprep.subr.mxu0 0.0
    %297 = vmatpush1.xpose.msra.mxu0 %v259
    %298 = vmatprep.subr.mxu0 0.0
    %299 = vmatpush1.xpose.msra.mxu0 %v256
    %300 = vmatprep.subr.mxu0 0.0
    %301 = vmatpush1.xpose.msra.mxu0 %v253
    %302 = vmatprep.subr.mxu0 0.0
    %303 = vmatpush1.xpose.msra.mxu0 %v250
    %304 = vmatprep.subr.mxu0 0.0
    %305 = vmatpush1.xpose.msra.mxu0 %v247
    %306 = vmatprep.subr.mxu0 0.0
    %307 = vmatpush1.xpose.msra.mxu0 %v244
    %308 = vmatprep.subr.mxu0 0.0
    %309 = vmatpush1.xpose.msra.mxu0 %v241
    %310 = vmatprep.subr.mxu0 0.0
    %311 = vmatpush1.xpose.msra.mxu0 %v238
    %312 = vmatprep.subr.mxu0 0.0
    %313 = vmatpush1.xpose.msra.mxu0 %v235
    %314 = vmatprep.subr.mxu0 0.0
    %315 = vmatpush2.xpose.msra.mxu0 0.0
    %316 = vmatprep.subr.mxu0 0.0
    %317 = vmatpush2.xpose.msra.mxu0 0.0
    %318 = vmatprep.subr.mxu0 0.0
    %319 = vmatpush2.xpose.msra.mxu0 0.0
    %320 = vmatprep.subr.mxu0 0.0
    %321 = vmatpush2.xpose.msra.mxu0 0.0
    %322 = vmatprep.subr.mxu0 0.0
    %323 = vmatpush2.xpose.msra.mxu0 0.0
    %324 = vmatprep.subr.mxu0 0.0
    %325 = vmatpush2.xpose.msra.mxu0 0.0
    %326 = vmatprep.subr.mxu0 0.0
    %327 = vmatpush2.xpose.msra.mxu0 0.0
    %328 = vmatprep.subr.mxu0 0.0
    %329 = vmatpush2.xpose.msra.mxu0 0.0
    %330 = vmatprep.subr.mxu0 0.0
    %331 = vmatpush2.xpose.msra.mxu0 0.0
    %332 = vmatprep.subr.mxu0 0.0
    %333 = vmatpush2.xpose.msra.mxu0 0.0
    %334 = vmatprep.subr.mxu0 0.0
    %335 = vmatpush2.xpose.msra.mxu0 0.0
    %336 = vmatprep.subr.mxu0 0.0
    %337 = vmatpush2.xpose.msra.mxu0 0.0
    %338 = vmatprep.subr.mxu0 0.0
    %339 = vmatpush2.xpose.msra.mxu0 0.0
    %340 = vmatprep.subr.mxu0 0.0
    %341 = vmatpush2.xpose.msra.mxu0 0.0
    %342 = vmatprep.subr.mxu0 0.0
    %343 = vmatpush2.xpose.msra.mxu0 0.0
    %344 = vmatprep.subr.mxu0 0.0
    %345 = vmatpush2.xpose.msra.mxu0 0.0
    %346 = vmatprep.mubr.f32.mxu0 0.0
    %347 = vmatmul.mubr.f32.gmra.mxu0 %v178
    %v348 = vpop.f32.mrf.mxu0
    %v349 = vadd.f32 %v84, %v348
    %v350 = vpop.f32.mrf.mxu0
    %351 = vmatprep.mubr.f32.mxu0 0.0
    %352 = vmatmul.mubr.f32.gmra.mxu0 %v181
    %v353 = vpop.f32.mrf.mxu0
    %v354 = vadd.f32 %v89, %v353
    %v355 = vpop.f32.mrf.mxu0
    %356 = vmatprep.mubr.f32.mxu0 0.0
    %357 = vmatmul.mubr.f32.gmra.mxu0 %v184
    %v358 = vpop.f32.mrf.mxu0
    %v359 = vadd.f32 %v94, %v358
    %v360 = vpop.f32.mrf.mxu0
    %361 = vmatprep.mubr.f32.mxu0 0.0
    %362 = vmatmul.mubr.f32.gmra.mxu0 %v187
    %v363 = vpop.f32.mrf.mxu0
    %v364 = vadd.f32 %v99, %v363
    %v365 = vpop.f32.mrf.mxu0
    %366 = vmatprep.mubr.f32.mxu0 0.0
    %367 = vmatmul.mubr.f32.gmra.mxu0 %v190
    %v368 = vpop.f32.mrf.mxu0
    %v369 = vadd.f32 %v104, %v368
    %v370 = vpop.f32.mrf.mxu0
    %371 = vmatprep.mubr.f32.mxu0 0.0
    %372 = vmatmul.mubr.f32.gmra.mxu0 %v193
    %v373 = vpop.f32.mrf.mxu0
    %v374 = vadd.f32 %v109, %v373
    %v375 = vpop.f32.mrf.mxu0
    %376 = vmatprep.mubr.f32.mxu0 0.0
    %377 = vmatmul.mubr.f32.gmra.mxu0 %v196
    %v378 = vpop.f32.mrf.mxu0
    %v379 = vadd.f32 %v114, %v378
    %v380 = vpop.f32.mrf.mxu0
    %381 = vmatprep.mubr.f32.mxu0 0.0
    %382 = vmatmul.mubr.f32.gmra.mxu0 %v199
    %v383 = vpop.f32.mrf.mxu0
    %v384 = vadd.f32 %v119, %v383
    %v385 = vpop.f32.mrf.mxu0
    %386 = vmatprep.mubr.f32.mxu0 0.0
    %387 = vmatmul.mubr.f32.gmra.mxu0 %v202
    %v388 = vpop.f32.mrf.mxu0
    %v389 = vadd.f32 %v124, %v388
    %v390 = vpop.f32.mrf.mxu0
    %391 = vmatprep.mubr.f32.mxu0 0.0
    %392 = vmatmul.mubr.f32.gmra.mxu0 %v205
    %v393 = vpop.f32.mrf.mxu0
    %v394 = vadd.f32 %v129, %v393
    %v395 = vpop.f32.mrf.mxu0
    %396 = vmatprep.mubr.f32.mxu0 0.0
    %397 = vmatmul.mubr.f32.gmra.mxu0 %v208
    %v398 = vpop.f32.mrf.mxu0
    %v399 = vadd.f32 %v134, %v398
    %v400 = vpop.f32.mrf.mxu0
    %401 = vmatprep.mubr.f32.mxu0 0.0
    %402 = vmatmul.mubr.f32.gmra.mxu0 %v211
    %v403 = vpop.f32.mrf.mxu0
    %v404 = vadd.f32 %v139, %v403
    %v405 = vpop.f32.mrf.mxu0
    %406 = vmatprep.mubr.f32.mxu0 0.0
    %407 = vmatmul.mubr.f32.gmra.mxu0 %v214
    %v408 = vpop.f32.mrf.mxu0
    %v409 = vadd.f32 %v144, %v408
    %v410 = vpop.f32.mrf.mxu0
    %411 = vmatprep.mubr.f32.mxu0 0.0
    %412 = vmatmul.mubr.f32.gmra.mxu0 %v217
    %v413 = vpop.f32.mrf.mxu0
    %v414 = vadd.f32 %v149, %v413
    %v415 = vpop.f32.mrf.mxu0
    %416 = vmatprep.mubr.f32.mxu0 0.0
    %417 = vmatmul.mubr.f32.gmra.mxu0 %v220
    %v418 = vpop.f32.mrf.mxu0
    %v419 = vadd.f32 %v154, %v418
    %v420 = vpop.f32.mrf.mxu0
    %421 = vmatprep.mubr.f32.mxu0 0.0
    %422 = vmatmul.mubr.f32.gmra.mxu0 %v223
    %v423 = vpop.f32.mrf.mxu0
    %v424 = vadd.f32 %v159, %v423
    %v425 = vpop.f32.mrf.mxu0
    %426 = vmatprep.mubr.f32.mxu0 0.0
    %427 = vmatmul.mubr.f32.gmra.mxu0 %v226
    %v428 = vpop.f32.mrf.mxu0
    %v429 = vadd.f32 %v164, %v428
    %v430 = vpop.f32.mrf.mxu0
    %431 = vmatprep.mubr.f32.mxu0 0.0
    %432 = vmatmul.mubr.f32.gmra.mxu0 %v229
    %v433 = vpop.f32.mrf.mxu0
    %v434 = vadd.f32 %v169, %v433
    %v435 = vpop.f32.mrf.mxu0
    %436 = vmatprep.mubr.f32.mxu0 0.0
    %437 = vmatmul.mubr.f32.gmra.mxu0 %v232
    %v438 = vpop.f32.mrf.mxu0
    %v439 = vadd.f32 %v174, %v438
    %v440 = vpop.f32.mrf.mxu0
    %441 = vdwg.mxu0
    %vm442 = vcmp.gt.f32.partialorder %v349, 0.0
    %vm443 = vcmp.gt.f32.partialorder %v354, 0.0
    %vm444 = vcmp.gt.f32.partialorder %v359, 0.0
    %vm445 = vcmp.gt.f32.partialorder %v364, 0.0
    %vm446 = vcmp.gt.f32.partialorder %v369, 0.0
    %vm447 = vcmp.gt.f32.partialorder %v374, 0.0
    %vm448 = vcmp.gt.f32.partialorder %v379, 0.0
    %vm449 = vcmp.gt.f32.partialorder %v384, 0.0
    %vm450 = vcmp.gt.f32.partialorder %v389, 0.0
    %vm451 = vcmp.gt.f32.partialorder %v394, 0.0
    %vm452 = vcmp.gt.f32.partialorder %v399, 0.0
    %vm453 = vcmp.gt.f32.partialorder %v404, 0.0
    %vm454 = vcmp.gt.f32.partialorder %v409, 0.0
    %vm455 = vcmp.gt.f32.partialorder %v414, 0.0
    %vm456 = vcmp.gt.f32.partialorder %v419, 0.0
    %vm457 = vcmp.gt.f32.partialorder %v424, 0.0
    %vm458 = vcmp.gt.f32.partialorder %v429, 0.0
    %vm459 = vcmp.gt.f32.partialorder %v434, 0.0
    %vm460 = vcmp.gt.f32.partialorder %v439, 0.0
    %v461 = vmul.f32 %v349, 0.01
    %v462 = vmul.f32 %v354, 0.01
    %v463 = vmul.f32 %v359, 0.01
    %v464 = vmul.f32 %v364, 0.01
    %v465 = vmul.f32 %v369, 0.01
    %v466 = vmul.f32 %v374, 0.01
    %v467 = vmul.f32 %v379, 0.01
    %v468 = vmul.f32 %v384, 0.01
    %v469 = vmul.f32 %v389, 0.01
    %v470 = vmul.f32 %v394, 0.01
    %v471 = vmul.f32 %v399, 0.01
    %v472 = vmul.f32 %v404, 0.01
    %v473 = vmul.f32 %v409, 0.01
    %v474 = vmul.f32 %v414, 0.01
    %v475 = vmul.f32 %v419, 0.01
    %v476 = vmul.f32 %v424, 0.01
    %v477 = vmul.f32 %v429, 0.01
    %v478 = vmul.f32 %v434, 0.01
    %v479 = vmul.f32 %v439, 0.01
    %v480 = vsel %vm442, %v349, %v461
    %v481 = vsel %vm443, %v354, %v462
    %v482 = vsel %vm444, %v359, %v463
    %v483 = vsel %vm445, %v364, %v464
    %v484 = vsel %vm446, %v369, %v465
    %v485 = vsel %vm447, %v374, %v466
    %v486 = vsel %vm448, %v379, %v467
    %v487 = vsel %vm449, %v384, %v468
    %v488 = vsel %vm450, %v389, %v469
    %v489 = vsel %vm451, %v394, %v470
    %v490 = vsel %vm452, %v399, %v471
    %v491 = vsel %vm453, %v404, %v472
    %v492 = vsel %vm454, %v409, %v473
    %v493 = vsel %vm455, %v414, %v474
    %v494 = vsel %vm456, %v419, %v475
    %v495 = vsel %vm457, %v424, %v476
    %v496 = vsel %vm458, %v429, %v477
    %v497 = vsel %vm459, %v434, %v478
    %v498 = vsel %vm460, %v439, %v479
    %v499 = vld [vmem:[%s3] sm:$0xff]
    %v500 = vld [vmem:[%s3 + $0x8] sm:$0xff]
    %v501 = vld [vmem:[%s3 + $0x10] sm:$0xff]
    %v502 = vld [vmem:[%s3 + $0x18] sm:$0xff]
    %v503 = vld [vmem:[%s3 + $0x20] sm:$0xff]
    %v504 = vld [vmem:[%s3 + $0x28] sm:$0xff]
    %v505 = vld [vmem:[%s3 + $0x30] sm:$0xff]
    %v506 = vld [vmem:[%s3 + $0x38] sm:$0xff]
    %v507 = vld [vmem:[%s3 + $0x40] sm:$0xff]
    %v508 = vld [vmem:[%s3 + $0x48] sm:$0xff]
    %v509 = vld [vmem:[%s3 + $0x50] sm:$0xff]
    %v510 = vld [vmem:[%s3 + $0x58] sm:$0xff]
    %v511 = vld [vmem:[%s3 + $0x60] sm:$0x3]
    %v512 = vld [vmem:[%s3 + $0x68] sm:$0x3]
    %v513 = vld [vmem:[%s4] sm:$0xff]
    %v514 = vld [vmem:[%s4 + $0x8] sm:$0xff]
    %v515 = vld [vmem:[%s4 + $0x10] sm:$0xff]
    %v516 = vld [vmem:[%s4 + $0x18] sm:$0xff]
    %v517 = vld [vmem:[%s4 + $0x20] sm:$0xff]
    %v518 = vld [vmem:[%s4 + $0x28] sm:$0xff]
    %v519 = vld [vmem:[%s4 + $0x30] sm:$0x3]
    %521 = vset.pattern.permute.xlu0 0
    %522 = vperm.xlu0 %521, %v513
    %v523 = vpop.permute.xlu0 %522
    %526 = vset.pattern.permute.xlu0 0
    %527 = vperm.xlu0 %526, %v514
    %v528 = vpop.permute.xlu0 %527
    %531 = vset.pattern.permute.xlu0 0
    %532 = vperm.xlu0 %531, %v515
    %v533 = vpop.permute.xlu0 %532
    %536 = vset.pattern.permute.xlu0 0
    %537 = vperm.xlu0 %536, %v516
    %v538 = vpop.permute.xlu0 %537
    %541 = vset.pattern.permute.xlu0 0
    %542 = vperm.xlu0 %541, %v517
    %v543 = vpop.permute.xlu0 %542
    %546 = vset.pattern.permute.xlu0 0
    %547 = vperm.xlu0 %546, %v518
    %v548 = vpop.permute.xlu0 %547
    %551 = vset.pattern.permute.xlu0 0
    %552 = vperm.xlu0 %551, %v519
    %v553 = vpop.permute.xlu0 %552
    %vm555 = vcmask 179200
    %v557 = vsel %vm555, %v500, 0
    %v560 = vsel %vm555, %v502, 0
    %v563 = vsel %vm555, %v504, 0
    %v566 = vsel %vm555, %v506, 0
    %v569 = vsel %vm555, %v508, 0
    %v572 = vsel %vm555, %v510, 0
    %v575 = vsel %vm555, %v512, 0
    %vm577 = vcmask 1045504
    %v579 = vsel %vm577, %v498, 0
    %581 = vmatprep.subr.mxu0 0.0
    %582 = vmatpush1.msra.mxu0 %v495
    %583 = vmatprep.subr.mxu0 0.0
    %584 = vmatpush1.msra.mxu0 %v494
    %585 = vmatprep.subr.mxu0 0.0
    %586 = vmatpush1.msra.mxu0 %v493
    %587 = vmatprep.subr.mxu0 0.0
    %588 = vmatpush1.msra.mxu0 %v492
    %589 = vmatprep.subr.mxu0 0.0
    %590 = vmatpush1.msra.mxu0 %v491
    %591 = vmatprep.subr.mxu0 0.0
    %592 = vmatpush1.msra.mxu0 %v490
    %593 = vmatprep.subr.mxu0 0.0
    %594 = vmatpush1.msra.mxu0 %v489
    %595 = vmatprep.subr.mxu0 0.0
    %596 = vmatpush1.msra.mxu0 %v488
    %597 = vmatprep.subr.mxu0 0.0
    %598 = vmatpush1.msra.mxu0 %v487
    %599 = vmatprep.subr.mxu0 0.0
    %600 = vmatpush1.msra.mxu0 %v486
    %601 = vmatprep.subr.mxu0 0.0
    %602 = vmatpush1.msra.mxu0 %v485
    %603 = vmatprep.subr.mxu0 0.0
    %604 = vmatpush1.msra.mxu0 %v484
    %605 = vmatprep.subr.mxu0 0.0
    %606 = vmatpush1.msra.mxu0 %v483
    %607 = vmatprep.subr.mxu0 0.0
    %608 = vmatpush1.msra.mxu0 %v482
    %609 = vmatprep.subr.mxu0 0.0
    %610 = vmatpush1.msra.mxu0 %v481
    %611 = vmatprep.subr.mxu0 0.0
    %612 = vmatpush1.msra.mxu0 %v480
    %613 = vmatprep.subr.mxu0 0.0
    %614 = vmatpush2.msra.mxu0 0.0
    %615 = vmatprep.subr.mxu0 0.0
    %616 = vmatpush2.msra.mxu0 0.0
    %617 = vmatprep.subr.mxu0 0.0
    %618 = vmatpush2.msra.mxu0 0.0
    %619 = vmatprep.subr.mxu0 0.0
    %620 = vmatpush2.msra.mxu0 0.0
    %621 = vmatprep.subr.mxu0 0.0
    %622 = vmatpush2.msra.mxu0 0.0
    %623 = vmatprep.subr.mxu0 0.0
    %624 = vmatpush2.msra.mxu0 0.0
    %625 = vmatprep.subr.mxu0 0.0
    %626 = vmatpush2.msra.mxu0 0.0
    %627 = vmatprep.subr.mxu0 0.0
    %628 = vmatpush2.msra.mxu0 0.0
    %629 = vmatprep.subr.mxu0 0.0
    %630 = vmatpush2.msra.mxu0 0.0
    %631 = vmatprep.subr.mxu0 0.0
    %632 = vmatpush2.msra.mxu0 0.0
    %633 = vmatprep.subr.mxu0 0.0
    %634 = vmatpush2.msra.mxu0 0.0
    %635 = vmatprep.subr.mxu0 0.0
    %636 = vmatpush2.msra.mxu0 0.0
    %637 = vmatprep.subr.mxu0 0.0
    %638 = vmatpush2.msra.mxu0 0.0
    %639 = vmatprep.subr.mxu0 0.0
    %640 = vmatpush2.msra.mxu0 %v579
    %641 = vmatprep.subr.mxu0 0.0
    %642 = vmatpush2.msra.mxu0 %v497
    %643 = vmatprep.subr.mxu0 0.0
    %644 = vmatpush2.msra.mxu0 %v496
    %645 = vmatprep.mubr.f32.mxu0 %v557
    %646 = vmatmul.mubr.f32.gmra.mxu0 %v499
    %v647 = vpop.f32.mrf.mxu0
    %v648 = vadd.f32 %v523, %v647
    %v649 = vpop.f32.mrf.mxu0
    %650 = vmatprep.mubr.f32.mxu0 %v560
    %651 = vmatmul.mubr.f32.gmra.mxu0 %v501
    %v652 = vpop.f32.mrf.mxu0
    %v653 = vadd.f32 %v528, %v652
    %v654 = vpop.f32.mrf.mxu0
    %655 = vmatprep.mubr.f32.mxu0 %v563
    %656 = vmatmul.mubr.f32.gmra.mxu0 %v503
    %v657 = vpop.f32.mrf.mxu0
    %v658 = vadd.f32 %v533, %v657
    %v659 = vpop.f32.mrf.mxu0
    %660 = vmatprep.mubr.f32.mxu0 %v566
    %661 = vmatmul.mubr.f32.gmra.mxu0 %v505
    %v662 = vpop.f32.mrf.mxu0
    %v663 = vadd.f32 %v538, %v662
    %v664 = vpop.f32.mrf.mxu0
    %665 = vmatprep.mubr.f32.mxu0 %v569
    %666 = vmatmul.mubr.f32.gmra.mxu0 %v507
    %v667 = vpop.f32.mrf.mxu0
    %v668 = vadd.f32 %v543, %v667
    %v669 = vpop.f32.mrf.mxu0
    %670 = vmatprep.mubr.f32.mxu0 %v572
    %671 = vmatmul.mubr.f32.gmra.mxu0 %v509
    %v672 = vpop.f32.mrf.mxu0
    %v673 = vadd.f32 %v548, %v672
    %v674 = vpop.f32.mrf.mxu0
    %675 = vmatprep.mubr.f32.mxu0 %v575
    %676 = vmatmul.mubr.f32.gmra.mxu0 %v511
    %v677 = vpop.f32.mrf.mxu0
    %v678 = vadd.f32 %v553, %v677
    %v679 = vpop.f32.mrf.mxu0
    %680 = vdwg.mxu0
    %vm681 = vcmp.gt.f32.partialorder %v648, 0.0
    %vm682 = vcmp.gt.f32.partialorder %v653, 0.0
    %vm683 = vcmp.gt.f32.partialorder %v658, 0.0
    %vm684 = vcmp.gt.f32.partialorder %v663, 0.0
    %vm685 = vcmp.gt.f32.partialorder %v668, 0.0
    %vm686 = vcmp.gt.f32.partialorder %v673, 0.0
    %vm687 = vcmp.gt.f32.partialorder %v678, 0.0
    %v688 = vmul.f32 %v648, 0.01
    %v689 = vmul.f32 %v653, 0.01
    %v690 = vmul.f32 %v658, 0.01
    %v691 = vmul.f32 %v663, 0.01
    %v692 = vmul.f32 %v668, 0.01
    %v693 = vmul.f32 %v673, 0.01
    %v694 = vmul.f32 %v678, 0.01
    %v695 = vsel %vm681, %v648, %v688
    %v696 = vsel %vm682, %v653, %v689
    %v697 = vsel %vm683, %v658, %v690
    %v698 = vsel %vm684, %v663, %v691
    %v699 = vsel %vm685, %v668, %v692
    %v700 = vsel %vm686, %v673, %v693
    %v701 = vsel %vm687, %v678, %v694
    %v702 = vld [vmem:[%s5] sm:$0xff]
    %v703 = vld [vmem:[%s5 + $0x8] sm:$0x3]
    %v704 = vld [vmem:[%s6] sm:$0xff]
    %v705 = vld [vmem:[%s6 + $0x8] sm:$0x3]
    %707 = vset.pattern.permute.xlu0 0
    %708 = vperm.xlu0 %707, %v704
    %v709 = vpop.permute.xlu0 %708
    %712 = vset.pattern.permute.xlu0 0
    %713 = vperm.xlu0 %712, %v705
    %v714 = vpop.permute.xlu0 %713
    %vm716 = vcmask 408576
    %v718 = vsel %vm716, %v702, 0
    %v721 = vsel %vm716, %v703, 0
    %vm723 = vcmask 1041408
    %v725 = vsel %vm723, %v701, 0
    %727 = vmatprep.subr.mxu0 0.0
    %728 = vmatpush1.msra.mxu0 0.0
    %729 = vmatprep.subr.mxu0 0.0
    %730 = vmatpush1.msra.mxu0 0.0
    %731 = vmatprep.subr.mxu0 0.0
    %732 = vmatpush1.msra.mxu0 0.0
    %733 = vmatprep.subr.mxu0 0.0
    %734 = vmatpush1.msra.mxu0 0.0
    %735 = vmatprep.subr.mxu0 0.0
    %736 = vmatpush1.msra.mxu0 0.0
    %737 = vmatprep.subr.mxu0 0.0
    %738 = vmatpush1.msra.mxu0 0.0
    %739 = vmatprep.subr.mxu0 0.0
    %740 = vmatpush1.msra.mxu0 0.0
    %741 = vmatprep.subr.mxu0 0.0
    %742 = vmatpush1.msra.mxu0 0.0
    %743 = vmatprep.subr.mxu0 0.0
    %744 = vmatpush1.msra.mxu0 0.0
    %745 = vmatprep.subr.mxu0 0.0
    %746 = vmatpush1.msra.mxu0 %v725
    %747 = vmatprep.subr.mxu0 0.0
    %748 = vmatpush1.msra.mxu0 %v700
    %749 = vmatprep.subr.mxu0 0.0
    %750 = vmatpush1.msra.mxu0 %v699
    %751 = vmatprep.subr.mxu0 0.0
    %752 = vmatpush1.msra.mxu0 %v698
    %753 = vmatprep.subr.mxu0 0.0
    %754 = vmatpush1.msra.mxu0 %v697
    %755 = vmatprep.subr.mxu0 0.0
    %756 = vmatpush1.msra.mxu0 %v696
    %757 = vmatprep.subr.mxu0 0.0
    %758 = vmatpush1.msra.mxu0 %v695
    %759 = vmatprep.subr.mxu0 0.0
    %760 = vmatpush2.msra.mxu0 0.0
    %761 = vmatprep.subr.mxu0 0.0
    %762 = vmatpush2.msra.mxu0 0.0
    %763 = vmatprep.subr.mxu0 0.0
    %764 = vmatpush2.msra.mxu0 0.0
    %765 = vmatprep.subr.mxu0 0.0
    %766 = vmatpush2.msra.mxu0 0.0
    %767 = vmatprep.subr.mxu0 0.0
    %768 = vmatpush2.msra.mxu0 0.0
    %769 = vmatprep.subr.mxu0 0.0
    %770 = vmatpush2.msra.mxu0 0.0
    %771 = vmatprep.subr.mxu0 0.0
    %772 = vmatpush2.msra.mxu0 0.0
    %773 = vmatprep.subr.mxu0 0.0
    %774 = vmatpush2.msra.mxu0 0.0
    %775 = vmatprep.subr.mxu0 0.0
    %776 = vmatpush2.msra.mxu0 0.0
    %777 = vmatprep.subr.mxu0 0.0
    %778 = vmatpush2.msra.mxu0 0.0
    %779 = vmatprep.subr.mxu0 0.0
    %780 = vmatpush2.msra.mxu0 0.0
    %781 = vmatprep.subr.mxu0 0.0
    %782 = vmatpush2.msra.mxu0 0.0
    %783 = vmatprep.subr.mxu0 0.0
    %784 = vmatpush2.msra.mxu0 0.0
    %785 = vmatprep.subr.mxu0 0.0
    %786 = vmatpush2.msra.mxu0 0.0
    %787 = vmatprep.subr.mxu0 0.0
    %788 = vmatpush2.msra.mxu0 0.0
    %789 = vmatprep.subr.mxu0 0.0
    %790 = vmatpush2.msra.mxu0 0.0
    %791 = vmatprep.mubr.f32.mxu0 0.0
    %792 = vmatmul.mubr.f32.gmra.mxu0 %v718
    %v793 = vpop.f32.mrf.mxu0
    %v794 = vadd.f32 %v709, %v793
    %v795 = vpop.f32.mrf.mxu0
    %796 = vmatprep.mubr.f32.mxu0 0.0
    %797 = vmatmul.mubr.f32.gmra.mxu0 %v721
    %v798 = vpop.f32.mrf.mxu0
    %v799 = vadd.f32 %v714, %v798
    %v800 = vpop.f32.mrf.mxu0
    %801 = vdwg.mxu0
    %802 = vst [vmem:[#allocation2] sm:$0xff] %v794
    %803 = vst [vmem:[#allocation2 + $0x8] sm:$0x3] %v799
    // Predicated region
    $region30: #{tpu_custom_call.1} parent=1 // pred_check
      _
    $region31: #{tpu_custom_call.1} parent=1 // pred_check_branch
      %805 = sbr.rel (0) target = $region33
    $region32: #{tpu_custom_call.1} parent=1 // pred_region
      %s807 = ssub.s32 256, 256
      %808 = vsyncadd [#allocation3], %s807
      %s809 = sshll.u32 [#allocation2], 4
      %s810 = int_to_ptr.vmem [resolvable:$true] %s809
      %815 = dma.vmem_to_hbm [thread:$0]  %s810, 256, %s7, [#allocation3], 128, 128, 8
    $region33: #{tpu_custom_call.1} parent=1 // pred_fallthru
      _
    // Predicated region
    $region34: #{tpu_custom_call.1} parent=1 // pred_check
      _
    $region35: #{tpu_custom_call.1} parent=1 // pred_check_branch
      %817 = sbr.rel (0) target = $region37
    $region36: #{tpu_custom_call.1} parent=1 // pred_region
      %818 = dma.done [#allocation3], 256
    $region37: #{tpu_custom_call.1} parent=1 // pred_fallthru
      _
    %819 = vsyncpa [#allocation3], 1

</llo_original>
